<compile_context>
chip_gen: v7x
topology: tpu7x:2x2x1
jax: 0.10.0
libtpu: 0.0.40
codegen_flags: <defaults>
</compile_context>

<pallas_src>
import math

import jax
import jax.numpy as jnp
from jax.experimental import pallas as pl
from jax.experimental.pallas import tpu as pltpu


# ---------------------------------------------------------------------------
# Pallas kernels
# ---------------------------------------------------------------------------
def _noisy_linear_train_kernel(x_ref, wmu_ref, wsig_ref, eps_in_ref,
                               eps_out_ref, beff_ref, o_ref, sig_acc):
    """Grid = (OUT tiles, IN tiles); axis 1 (K) is the reduction axis."""
    k = pl.program_id(1)

    @pl.when(k == 0)
    def _():
        # Output block is resident across k (its index_map ignores k); seed it
        # with the pre-folded bias so the finalize only adds the sigma term.
        o_ref[...] = jnp.zeros_like(o_ref) + beff_ref[...]
        sig_acc[...] = jnp.zeros_like(sig_acc)

    x = x_ref[...]                                             # (B, tk) f32

    # mu path: weights pre-transposed to (IN, OUT) -> MXU-natural (K, N),
    # streamed in bf16, accumulated in f32 directly into the output block.
    o_ref[...] += jnp.dot(x.astype(wmu_ref.dtype), wmu_ref[...],
                          preferred_element_type=jnp.float32)

    # sigma path (factorized noise): (x * eps_in) @ W_sigma; eps_out applied
    # once at finalize instead of per K step.
    xs = (x * eps_in_ref[...]).astype(wsig_ref.dtype)          # (B, tk)
    sig_acc[...] += jnp.dot(xs, wsig_ref[...],
                            preferred_element_type=jnp.float32)

    @pl.when(k == pl.num_programs(1) - 1)
    def _():
        o_ref[...] += eps_out_ref[...] * sig_acc[...]


def _noisy_linear_eval_kernel(x_ref, wmu_ref, bmu_ref, o_ref):
    k = pl.program_id(1)

    @pl.when(k == 0)
    def _():
        o_ref[...] = jnp.zeros_like(o_ref) + bmu_ref[...]

    o_ref[...] += jnp.dot(x_ref[...].astype(wmu_ref.dtype), wmu_ref[...],
                          preferred_element_type=jnp.float32)


# ---------------------------------------------------------------------------
# Wrapper helpers
# ---------------------------------------------------------------------------
def _round_up(x, m):
    return ((x + m - 1) // m) * m


def _vmem_budget():
    """Generation-aware (tile cap, vmem_limit_bytes)."""
    try:
        cap_bytes = int(getattr(pltpu.get_tpu_info(), "vmem_capacity_bytes",
                                64 * 1024 * 1024))
    except Exception:                          # non-TPU / interpret fallback
        cap_bytes = 64 * 1024 * 1024
    if cap_bytes >= 100 * 1024 * 1024:         # v5e / v6e: 128 MiB per core
        return 2048, 96 * 1024 * 1024
    return 1024, 48 * 1024 * 1024              # v7x: 64 MiB per core


def _pick_tile(dim, cap):
    """Pick a tile (multiple of 128, <= cap) and the padded dim (multiple of
    the tile).  Cost ~ streamed columns + ~256 columns' worth of per-step
    overhead: avoids both the 128-tile fallback on awkward dims and
    gratuitous zero padding."""
    dim128 = _round_up(max(int(dim), 1), 128)
    cap = max(128, min(cap, dim128))
    best = None
    t = 128
    while t <= cap:
        padded = _round_up(dim128, t)
        cost = padded + 256 * (padded // t)
        key = (cost, -t)
        if best is None or key < best[0]:
            best = (key, t, padded)
        t += 128
    return best[1], best[2]


def _pick_out_tile(out_f, cap):
    """Like _pick_tile, but guarantees >= 2 OUT tiles whenever out >= 256 so
    the "parallel" OUT grid axis can shard across v7x's two TensorCores."""
    out128 = _round_up(max(int(out_f), 1), 128)
    if out128 >= 256:
        cap = min(cap, max(128, (out128 // 2) // 128 * 128))
    return _pick_tile(out_f, cap)


def _pad2(a, rows, cols):
    r, c = a.shape
    if r == rows and c == cols:
        return a
    return jnp.pad(a, ((0, rows - r), (0, cols - c)))


# ---------------------------------------------------------------------------
# Forward wrapper
# ---------------------------------------------------------------------------
def noisy_linear_forward(x, params, training=True):
    """x: (B, in_features) f32. Returns (B, out_features) f32."""
    B, in_f = x.shape
    out_f = params["bias_mu"].shape[0]

    tile_cap, vmem_limit = _vmem_budget()
    b_pad = _round_up(B, 8)
    tk, in_pad = _pick_tile(in_f, tile_cap)
    tn, out_pad = _pick_out_tile(out_f, tile_cap)
    grid = (out_pad // tn, in_pad // tk)

    xp = _pad2(x, b_pad, in_pad)
    wmu = _pad2(params["weight_mu_t"], in_pad, out_pad)

    # TODO(synk): for large RL batches (B >~ 512), keep x resident across OUT
    # tiles (full-K block with constant index_map) to cut x re-streaming.
    x_spec = pl.BlockSpec((b_pad, tk), lambda j, k: (0, k))
    w_spec = pl.BlockSpec((tk, tn), lambda j, k: (k, j))
    row_in = pl.BlockSpec((1, tk), lambda j, k: (0, k))
    row_out = pl.BlockSpec((1, tn), lambda j, k: (0, j))
    o_spec = pl.BlockSpec((b_pad, tn), lambda j, k: (0, j))

    compiler_params = pltpu.CompilerParams(
        dimension_semantics=("parallel", "arbitrary"),
        vmem_limit_bytes=vmem_limit,
    )
    out_shape = jax.ShapeDtypeStruct((b_pad, out_pad), jnp.float32)

    if training:
        wsig = _pad2(params["weight_sigma_t"], in_pad, out_pad)
        eps_in = _pad2(params["eps_in"].reshape(1, in_f).astype(jnp.float32),
                       1, in_pad)
        eps_out = _pad2(params["eps_out"].reshape(1, out_f).astype(jnp.float32),
                        1, out_pad)
        # Bias folded once in the wrapper: b_eff = b_mu + b_sigma * eps_out.
        b_eff = params["bias_mu"] + params["bias_sigma"] * params["eps_out"]
        b_eff = _pad2(b_eff.reshape(1, out_f).astype(jnp.float32), 1, out_pad)

        y = pl.pallas_call(
            _noisy_linear_train_kernel,
            out_shape=out_shape,
            grid_spec=pltpu.PrefetchScalarGridSpec(
                num_scalar_prefetch=0,
                grid=grid,
                in_specs=[x_spec, w_spec, w_spec, row_in, row_out, row_out],
                out_specs=o_spec,
                scratch_shapes=[pltpu.VMEM((b_pad, tn), jnp.float32)],
            ),
            compiler_params=compiler_params,
        )(xp, wmu, wsig, eps_in, eps_out, b_eff)
    else:
        bmu = _pad2(params["bias_mu"].reshape(1, out_f).astype(jnp.float32),
                    1, out_pad)
        y = pl.pallas_call(
            _noisy_linear_eval_kernel,
            out_shape=out_shape,
            grid_spec=pltpu.PrefetchScalarGridSpec(
                num_scalar_prefetch=0,
                grid=grid,
                in_specs=[x_spec, w_spec, row_out],
                out_specs=o_spec,
            ),
            compiler_params=compiler_params,
        )(xp, wmu, bmu)

    return y[:B, :out_f].astype(x.dtype)


# ---------------------------------------------------------------------------
# Parameter / noise initialization (mirrors the PyTorch module)
# ---------------------------------------------------------------------------
def _scale_noise(key, size):
    x = jax.random.normal(key, (size,), dtype=jnp.float32)
    return jnp.sign(x) * jnp.sqrt(jnp.abs(x))


def init_noisy_linear(key, in_features, out_features, std_init=0.5,
                      weight_dtype=jnp.bfloat16):
    k_wmu, k_bmu, k_ein, k_eout = jax.random.split(key, 4)
    mu_range = 1.0 / math.sqrt(in_features)

    weight_mu = jax.random.uniform(
        k_wmu, (out_features, in_features), jnp.float32, -mu_range, mu_range)
    weight_sigma = jnp.full((out_features, in_features),
                            std_init / math.sqrt(in_features), jnp.float32)
    bias_mu = jax.random.uniform(
        k_bmu, (out_features,), jnp.float32, -mu_range, mu_range)
    bias_sigma = jnp.full((out_features,),
                          std_init / math.sqrt(out_features), jnp.float32)

    # Factorized noise (PyTorch stores the dense outer product; we keep the
    # factors: weight_epsilon == outer(eps_out, eps_in), bias_epsilon == eps_out).
    eps_in = _scale_noise(k_ein, in_features)
    eps_out = _scale_noise(k_eout, out_features)

    return {
        # Stored once: pre-transposed to (IN, OUT) (MXU-natural (K, N), no
        # in-kernel .T) and in bf16 so the HBM-bound kernel streams half the
        # weight bytes.  Accumulation in-kernel stays f32.
        "weight_mu_t": weight_mu.T.astype(weight_dtype),
        "weight_sigma_t": weight_sigma.T.astype(weight_dtype),
        "bias_mu": bias_mu,
        "bias_sigma": bias_sigma,
        "eps_in": eps_in,
        "eps_out": eps_out,
    }


# ---------------------------------------------------------------------------
# Pure-JAX reference (DENSE epsilon, exactly like the PyTorch module)
# ---------------------------------------------------------------------------
def reference_forward(x, p, training=True):
    w_mu = p["weight_mu_t"].astype(jnp.float32).T
    w_sig = p["weight_sigma_t"].astype(jnp.float32).T
    if training:
        w_eps = jnp.outer(p["eps_out"], p["eps_in"])
        w = w_mu + w_sig * w_eps
        b = p["bias_mu"] + p["bias_sigma"] * p["eps_out"]
    else:
        w, b = w_mu, p["bias_mu"]
    return jnp.dot(x, w.T, precision=jax.lax.Precision.HIGHEST) + b


if __name__ == "__main__":
    key = jax.random.PRNGKey(0)
    k_p1, k_x1, k_p2, k_x2 = jax.random.split(key, 4)

    # Lane-aligned shapes (multiples of 128): zero padding overhead.
    B, in_f, out_f = 8, 128, 256
    params = init_noisy_linear(k_p1, in_f, out_f, std_init=0.5)
    x = jax.random.normal(k_x1, (B, in_f), dtype=jnp.float32)

    y_train = jax.block_until_ready(noisy_linear_forward(x, params, training=True))
    y_eval = jax.block_until_ready(noisy_linear_forward(x, params, training=False))
    assert y_train.shape == (B, out_f) and y_eval.shape == (B, out_f)
    # bf16-streamed weights/activations vs. f32 HIGHEST-precision dense
    # reference -> loosened tolerances.
    assert jnp.allclose(y_train, reference_forward(x, params, True),
                        atol=5e-2, rtol=5e-2)
    assert jnp.allclose(y_eval, reference_forward(x, params, False),
                        atol=5e-2, rtol=5e-2)

    # Non-aligned shapes exercise the zero-padding / tile-picking path.
    B2, in2, out2 = 5, 100, 72
    params2 = init_noisy_linear(k_p2, in2, out2, std_init=0.5)
    x2 = jax.random.normal(k_x2, (B2, in2), dtype=jnp.float32)
    y2 = jax.block_until_ready(noisy_linear_forward(x2, params2, training=True))
    assert y2.shape == (B2, out2)
    assert jnp.allclose(y2, reference_forward(x2, params2, True),
                        atol=5e-2, rtol=5e-2)

    # TODO(synk): optional further win — generate eps_in/eps_out in-kernel via
    # pltpu.prng_seed/prng_random_bits (seed via scalar prefetch) to fuse
    # reset_noise into the forward.
    print("KERNEL_OK")
</pallas_src>

<mosaic_0001>
module attributes {stable_mosaic.version = 11 : i64} {
  func.func @_noisy_linear_train_kernel(%arg0: i32, %arg1: i32, %arg2: memref<8x128xf32, #tpu.memory_space<vmem>>, %arg3: memref<128x128xbf16, #tpu.memory_space<vmem>>, %arg4: memref<128x128xbf16, #tpu.memory_space<vmem>>, %arg5: memref<1x128xf32, #tpu.memory_space<vmem>>, %arg6: memref<1x128xf32, #tpu.memory_space<vmem>>, %arg7: memref<1x128xf32, #tpu.memory_space<vmem>>, %arg8: memref<8x128xf32, #tpu.memory_space<vmem>>, %arg9: memref<8x128xf32, #tpu.memory_space<vmem>>) attributes {dimension_semantics = [#tpu.dimension_semantics<parallel>, #tpu.dimension_semantics<arbitrary>], iteration_bounds = array<i64: 2, 1>, scalar_prefetch = 0 : i64, scratch_operands = 1 : i64, tpu.core_type = #tpu.core_type<tc>, window_params = [{transform_indices = @transform_0, window_bounds = array<i64: 8, 128>}, {transform_indices = @transform_1, window_bounds = array<i64: 128, 128>}, {transform_indices = @transform_2, window_bounds = array<i64: 128, 128>}, {transform_indices = @transform_3, window_bounds = array<i64: 1, 128>}, {transform_indices = @transform_4, window_bounds = array<i64: 1, 128>}, {transform_indices = @transform_5, window_bounds = array<i64: 1, 128>}, {transform_indices = @transform_6, window_bounds = array<i64: 8, 128>}]} {
    %c0_i32 = arith.constant 0 : i32
    %0 = arith.cmpi eq, %arg1, %c0_i32 : i32
    %1 = arith.extui %0 : i1 to i32
    %c0_i32_0 = arith.constant 0 : i32
    %2 = arith.cmpi ne, %1, %c0_i32_0 : i32
    scf.if %2 {
      %cst_19 = arith.constant 0.000000e+00 : f32
      %22 = vector.broadcast %cst_19 : f32 to vector<8x128xf32>
      %c0_20 = arith.constant 0 : index
      %c0_21 = arith.constant 0 : index
      %23 = vector.load %arg7[%c0_20, %c0_21] : memref<1x128xf32, #tpu.memory_space<vmem>>, vector<1x128xf32>
      %24 = vector.broadcast %23 : vector<1x128xf32> to vector<8x128xf32>
      %25 = arith.addf %22, %24 : vector<8x128xf32>
      %c0_22 = arith.constant 0 : index
      %c0_23 = arith.constant 0 : index
      %26 = vector.load %arg8[%c0_22, %c0_23] : memref<8x128xf32, #tpu.memory_space<vmem>>, vector<8x128xf32>
      tpu.vector_store %arg8[%c0_22, %c0_23], %25 {strides = array<i32>} : memref<8x128xf32, #tpu.memory_space<vmem>>, vector<8x128xf32>,
      %cst_24 = arith.constant 0.000000e+00 : f32
      %27 = vector.broadcast %cst_24 : f32 to vector<8x128xf32>
      %c0_25 = arith.constant 0 : index
      %c0_26 = arith.constant 0 : index
      %28 = vector.load %arg9[%c0_25, %c0_26] : memref<8x128xf32, #tpu.memory_space<vmem>>, vector<8x128xf32>
      tpu.vector_store %arg9[%c0_25, %c0_26], %27 {strides = array<i32>} : memref<8x128xf32, #tpu.memory_space<vmem>>, vector<8x128xf32>,
    } else {
    }
    %c0 = arith.constant 0 : index
    %c0_1 = arith.constant 0 : index
    %3 = vector.load %arg2[%c0, %c0_1] : memref<8x128xf32, #tpu.memory_space<vmem>>, vector<8x128xf32>
    %c0_2 = arith.constant 0 : index
    %c0_3 = arith.constant 0 : index
    %4 = vector.load %arg8[%c0_2, %c0_3] : memref<8x128xf32, #tpu.memory_space<vmem>>, vector<8x128xf32>
    %5 = arith.truncf %3 : vector<8x128xf32> to vector<8x128xbf16>
    %c0_4 = arith.constant 0 : index
    %c0_5 = arith.constant 0 : index
    %6 = vector.load %arg3[%c0_4, %c0_5] : memref<128x128xbf16, #tpu.memory_space<vmem>>, vector<128x128xbf16>
    %cst = arith.constant dense<0.000000e+00> : vector<8x128xf32>
    %7 = tpu.matmul %5, %6, %cst {dimension_numbers = #tpu.dot_dimension_numbers<[1], [0], [0], [1], [0, 0, 1, 1], [], []>} : vector<8x128xbf16>, vector<128x128xbf16>, vector<8x128xf32> -> vector<8x128xf32>
    %8 = arith.addf %4, %7 : vector<8x128xf32>
    %c0_6 = arith.constant 0 : index
    %c0_7 = arith.constant 0 : index
    %9 = vector.load %arg8[%c0_6, %c0_7] : memref<8x128xf32, #tpu.memory_space<vmem>>, vector<8x128xf32>
    tpu.vector_store %arg8[%c0_6, %c0_7], %8 {strides = array<i32>} : memref<8x128xf32, #tpu.memory_space<vmem>>, vector<8x128xf32>,
    %c0_8 = arith.constant 0 : index
    %c0_9 = arith.constant 0 : index
    %10 = vector.load %arg5[%c0_8, %c0_9] : memref<1x128xf32, #tpu.memory_space<vmem>>, vector<1x128xf32>
    %11 = vector.broadcast %10 : vector<1x128xf32> to vector<8x128xf32>
    %12 = arith.mulf %3, %11 : vector<8x128xf32>
    %13 = arith.truncf %12 : vector<8x128xf32> to vector<8x128xbf16>
    %c0_10 = arith.constant 0 : index
    %c0_11 = arith.constant 0 : index
    %14 = vector.load %arg9[%c0_10, %c0_11] : memref<8x128xf32, #tpu.memory_space<vmem>>, vector<8x128xf32>
    %c0_12 = arith.constant 0 : index
    %c0_13 = arith.constant 0 : index
    %15 = vector.load %arg4[%c0_12, %c0_13] : memref<128x128xbf16, #tpu.memory_space<vmem>>, vector<128x128xbf16>
    %cst_14 = arith.constant dense<0.000000e+00> : vector<8x128xf32>
    %16 = tpu.matmul %13, %15, %cst_14 {dimension_numbers = #tpu.dot_dimension_numbers<[1], [0], [0], [1], [0, 0, 1, 1], [], []>} : vector<8x128xbf16>, vector<128x128xbf16>, vector<8x128xf32> -> vector<8x128xf32>
    %17 = arith.addf %14, %16 : vector<8x128xf32>
    %c0_15 = arith.constant 0 : index
    %c0_16 = arith.constant 0 : index
    %18 = vector.load %arg9[%c0_15, %c0_16] : memref<8x128xf32, #tpu.memory_space<vmem>>, vector<8x128xf32>
    tpu.vector_store %arg9[%c0_15, %c0_16], %17 {strides = array<i32>} : memref<8x128xf32, #tpu.memory_space<vmem>>, vector<8x128xf32>,
    %c0_i32_17 = arith.constant 0 : i32
    %19 = arith.cmpi eq, %arg1, %c0_i32_17 : i32
    %20 = arith.extui %19 : i1 to i32
    %c0_i32_18 = arith.constant 0 : i32
    %21 = arith.cmpi ne, %20, %c0_i32_18 : i32
    scf.if %21 {
      %c0_19 = arith.constant 0 : index
      %c0_20 = arith.constant 0 : index
      %22 = vector.load %arg8[%c0_19, %c0_20] : memref<8x128xf32, #tpu.memory_space<vmem>>, vector<8x128xf32>
      %c0_21 = arith.constant 0 : index
      %c0_22 = arith.constant 0 : index
      %23 = vector.load %arg6[%c0_21, %c0_22] : memref<1x128xf32, #tpu.memory_space<vmem>>, vector<1x128xf32>
      %c0_23 = arith.constant 0 : index
      %c0_24 = arith.constant 0 : index
      %24 = vector.load %arg9[%c0_23, %c0_24] : memref<8x128xf32, #tpu.memory_space<vmem>>, vector<8x128xf32>
      %25 = vector.broadcast %23 : vector<1x128xf32> to vector<8x128xf32>
      %26 = arith.mulf %25, %24 : vector<8x128xf32>
      %27 = arith.addf %22, %26 : vector<8x128xf32>
      %c0_25 = arith.constant 0 : index
      %c0_26 = arith.constant 0 : index
      %28 = vector.load %arg8[%c0_25, %c0_26] : memref<8x128xf32, #tpu.memory_space<vmem>>, vector<8x128xf32>
      tpu.vector_store %arg8[%c0_25, %c0_26], %27 {strides = array<i32>} : memref<8x128xf32, #tpu.memory_space<vmem>>, vector<8x128xf32>,
    } else {
    }
    return
  }
  func.func @transform_0(%arg0: i32, %arg1: i32) -> (i32, i32) {
    %c0_i32 = arith.constant 0 : i32
    %c0_i32_0 = arith.constant 0 : i32
    return %c0_i32, %arg1 : i32, i32
  }
  func.func @transform_1(%arg0: i32, %arg1: i32) -> (i32, i32) {
    %c0_i32 = arith.constant 0 : i32
    return %arg1, %arg0 : i32, i32
  }
  func.func @transform_2(%arg0: i32, %arg1: i32) -> (i32, i32) {
    %c0_i32 = arith.constant 0 : i32
    return %arg1, %arg0 : i32, i32
  }
  func.func @transform_3(%arg0: i32, %arg1: i32) -> (i32, i32) {
    %c0_i32 = arith.constant 0 : i32
    %c0_i32_0 = arith.constant 0 : i32
    return %c0_i32, %arg1 : i32, i32
  }
  func.func @transform_4(%arg0: i32, %arg1: i32) -> (i32, i32) {
    %c0_i32 = arith.constant 0 : i32
    %c0_i32_0 = arith.constant 0 : i32
    return %c0_i32, %arg0 : i32, i32
  }
  func.func @transform_5(%arg0: i32, %arg1: i32) -> (i32, i32) {
    %c0_i32 = arith.constant 0 : i32
    %c0_i32_0 = arith.constant 0 : i32
    return %c0_i32, %arg0 : i32, i32
  }
  func.func @transform_6(%arg0: i32, %arg1: i32) -> (i32, i32) {
    %c0_i32 = arith.constant 0 : i32
    %c0_i32_0 = arith.constant 0 : i32
    return %c0_i32, %arg0 : i32, i32
  }
}

</mosaic_0001>

<llo_original>
// kernel: tpu_custom_call.1
$region0: #{tpu_custom_call.1}
  #allocation0 [shape = 'u32[]', space=smem, size = 0x4, offset = 0x4, fixed_abs, tag = 'smem constant byte address 0x4 - core index']
  #allocation1 [shape = 'u32[144,128]{1,0:T(1,128)}', space=vmem, size = 0x12000, scoped, tag = 'internal scratch']
  #allocation2 [shape = 'f32[8,128]{1,0:T(8,128)}', space=vmem, size = 0x1000, scoped, tag = 'scratch operand']
  %s0 = inlined_call_operand.hbm [shape: f32[8,128], index: 0, kind: input, shape index: {}]
  %s1 = inlined_call_operand.hbm [shape: bf16[128,256], index: 1, kind: input, shape index: {}]
  %s2 = inlined_call_operand.hbm [shape: bf16[128,256], index: 2, kind: input, shape index: {}]
  %s3 = inlined_call_operand.vmem [shape: f32[1,128], index: 3, kind: input, shape index: {}]
  %s4 = inlined_call_operand.vmem [shape: f32[1,256], index: 4, kind: input, shape index: {}]
  %s5 = inlined_call_operand.vmem [shape: f32[1,256], index: 5, kind: input, shape index: {}]
  %s6 = inlined_call_operand.hbm [shape: f32[8,256], index: 6, kind: output, shape index: {}]
  %s7 = sld [smem:[#allocation0]]
  $region77: #{tpu_custom_call.1} parent=0
    _
  %s9 = ssub.s32 1, %s7
  %s10 = scalar_select 0, %s9, %s7
  $region1: #{tpu_custom_call.1} parent=0
    #allocation3 [shape = 'u8[4096]{0}', space=vmem, size = 0x1000, scoped, tag = 'input window, operand 0, single buffered']
    #allocation4 [shape = 's32[2]{0}', space=sflag, size = 0x8, scoped, tag = 'scoped memory for tpu_custom_call.1']
    #allocation5 [shape = 's32[2]{0}', space=sflag, size = 0x8, scoped, tag = 'scoped memory for tpu_custom_call.1']
    #allocation6 [shape = 'u8[65536]{0}', space=vmem, size = 0x10000, scoped, tag = 'input window, operand 1']
    #allocation7 [shape = 's32[2]{0}', space=sflag, size = 0x8, scoped, tag = 'scoped memory for tpu_custom_call.1']
    #allocation8 [shape = 'u8[65536]{0}', space=vmem, size = 0x10000, scoped, tag = 'input window, operand 2']
    #allocation9 [shape = 'u8[8192]{0}', space=vmem, size = 0x2000, scoped, tag = 'output window, operand 0']
    %11 = vsyncpa [#allocation4], 0
    %12 = vsyncpa [#allocation7], 0
    %s13 = scalar_lea.sflag [#allocation7], 1
    %14 = vsyncpa %s13, 0
    %15 = vsyncpa [#allocation5], 0
    %s16 = scalar_lea.sflag [#allocation5], 1
    %17 = vsyncpa %s16, 0
    loop: start=0, step=1, limit=4
    $region2: #{tpu_custom_call.1} parent=1 // loop_pre_header
      _
    $region3: #{tpu_custom_call.1} parent=1 // loop_header
      %s19 = sphi 0, %s23
      %p20 = scmp.ge.s32.totalorder %s19, 4
      %s26 = sphi 0, %s38
      %s27 = sphi 0, %s34
      %s28 = sphi 0, %s26
      %s29 = sphi 0, %s27
      %s30 = sphi 0, %s28
      %s31 = sphi 0, %s29
      %s41 = sphi 0, %s43
      %s44 = sphi 0, %s41
      %s45 = sphi 0, %s44
      %s61 = sphi 0, %s45
      %s69 = sphi 0, %s71
      %s72 = sphi 0, %s69
      %s73 = sphi 0, %s72
      %s89 = sphi 0, %s73
      %s97 = sphi 0, %s99
      %s100 = sphi 0, %s97
      %s101 = sphi 0, %s100
      %s117 = sphi 0, %s101
      %s123 = sphi 0, %s125
      %s126 = sphi 0, %s123
      %s127 = sphi 0, %s126
      %s143 = sphi 0, %s127
      %s149 = sphi 0, %s151
      %s152 = sphi 0, %s149
      %s153 = sphi 0, %s152
      %s169 = sphi 0, %s153
      %s175 = sphi 0, %s177
      %s178 = sphi 0, %s175
      %s179 = sphi 0, %s178
      %s195 = sphi 0, %s179
      %s201 = sphi 0, %s203
      %s204 = sphi 0, %s201
      %s205 = sphi 0, %s204
      %s221 = sphi 0, %s205
    $region4: #{tpu_custom_call.1} parent=1 // loop_header_branch
      %22 = sbr.rel (%p20) target = $region8
    $region5: #{tpu_custom_call.1} parent=1 // loop_body
      %s24 = ssub.s32 %s19, 1
      %s25 = ssub.s32 %s19, 2
      %s32 = sadd.s32 1, %s27
      %p33 = scmp.ge.s32.totalorder %s32, 1
      %s34 = scalar_select %p33, 0, %s32
      %s35 = sadd.s32 1, %s26
      %s36 = scalar_select %p33, %s35, %s26
      %p37 = scmp.ge.s32.totalorder %s36, 2
      %s38 = scalar_select %p37, 0, %s36
      %s39 = ssub.s32 %s27, %s34
      %p40 = scmp.eq.s32.totalorder %s39, 0
      %s42 = sadd.s32 %s41, 1
      %s43 = scalar_select %p40, %s41, %s42
      %p46 = pneg %p40
      %p47 = scmp.eq.s32.totalorder %s19, 1
      %p48 = por %p46, %p47
      %p49 = scmp.ne.s32.totalorder %s41, %s44
      %p50 = scmp.eq.s32.totalorder %s19, 0
      %p51 = por %p49, %p50
      %p52 = scmp.ne.s32.totalorder %s41, %s44
      %p53 = scmp.eq.s32.totalorder %s24, 1
      %p54 = por %p52, %p53
      %p55 = scmp.ne.s32.totalorder %s44, %s45
      %p56 = scmp.eq.s32.totalorder %s24, 0
      %p57 = por %p55, %p56
      %p58 = scmp.ne.s32.totalorder %s44, %s45
      %p59 = scmp.eq.s32.totalorder %s25, 1
      %p60 = por %p58, %p59
      %p62 = scmp.ne.s32.totalorder %s45, %s61
      %p63 = scmp.eq.s32.totalorder %s25, 0
      %p64 = por %p62, %p63
      %s65 = ssub.s32 %s27, %s34
      %s66 = ssub.s32 %s26, %s38
      %s67 = sor.u32 %s65, %s66
      %p68 = scmp.eq.s32.totalorder %s67, 0
      %s70 = sadd.s32 %s69, 1
      %s71 = scalar_select %p68, %s69, %s70
      %p74 = pneg %p68
      %p75 = scmp.eq.s32.totalorder %s19, 1
      %p76 = por %p74, %p75
      %p77 = scmp.ne.s32.totalorder %s69, %s72
      %p78 = scmp.eq.s32.totalorder %s19, 0
      %p79 = por %p77, %p78
      %p80 = scmp.ne.s32.totalorder %s69, %s72
      %p81 = scmp.eq.s32.totalorder %s24, 1
      %p82 = por %p80, %p81
      %p83 = scmp.ne.s32.totalorder %s72, %s73
      %p84 = scmp.eq.s32.totalorder %s24, 0
      %p85 = por %p83, %p84
      %p86 = scmp.ne.s32.totalorder %s72, %s73
      %p87 = scmp.eq.s32.totalorder %s25, 1
      %p88 = por %p86, %p87
      %p90 = scmp.ne.s32.totalorder %s73, %s89
      %p91 = scmp.eq.s32.totalorder %s25, 0
      %p92 = por %p90, %p91
      %s93 = ssub.s32 %s27, %s34
      %s94 = ssub.s32 %s26, %s38
      %s95 = sor.u32 %s93, %s94
      %p96 = scmp.eq.s32.totalorder %s95, 0
      %s98 = sadd.s32 %s97, 1
      %s99 = scalar_select %p96, %s97, %s98
      %p102 = pneg %p96
      %p103 = scmp.eq.s32.totalorder %s19, 1
      %p104 = por %p102, %p103
      %p105 = scmp.ne.s32.totalorder %s97, %s100
      %p106 = scmp.eq.s32.totalorder %s19, 0
      %p107 = por %p105, %p106
      %p108 = scmp.ne.s32.totalorder %s97, %s100
      %p109 = scmp.eq.s32.totalorder %s24, 1
      %p110 = por %p108, %p109
      %p111 = scmp.ne.s32.totalorder %s100, %s101
      %p112 = scmp.eq.s32.totalorder %s24, 0
      %p113 = por %p111, %p112
      %p114 = scmp.ne.s32.totalorder %s100, %s101
      %p115 = scmp.eq.s32.totalorder %s25, 1
      %p116 = por %p114, %p115
      %p118 = scmp.ne.s32.totalorder %s101, %s117
      %p119 = scmp.eq.s32.totalorder %s25, 0
      %p120 = por %p118, %p119
      %s121 = ssub.s32 %s27, %s34
      %p122 = scmp.eq.s32.totalorder %s121, 0
      %s124 = sadd.s32 %s123, 1
      %s125 = scalar_select %p122, %s123, %s124
      %p128 = pneg %p122
      %p129 = scmp.eq.s32.totalorder %s19, 1
      %p130 = por %p128, %p129
      %p131 = scmp.ne.s32.totalorder %s123, %s126
      %p132 = scmp.eq.s32.totalorder %s19, 0
      %p133 = por %p131, %p132
      %p134 = scmp.ne.s32.totalorder %s123, %s126
      %p135 = scmp.eq.s32.totalorder %s24, 1
      %p136 = por %p134, %p135
      %p137 = scmp.ne.s32.totalorder %s126, %s127
      %p138 = scmp.eq.s32.totalorder %s24, 0
      %p139 = por %p137, %p138
      %p140 = scmp.ne.s32.totalorder %s126, %s127
      %p141 = scmp.eq.s32.totalorder %s25, 1
      %p142 = por %p140, %p141
      %p144 = scmp.ne.s32.totalorder %s127, %s143
      %p145 = scmp.eq.s32.totalorder %s25, 0
      %p146 = por %p144, %p145
      %s147 = ssub.s32 %s26, %s38
      %p148 = scmp.eq.s32.totalorder %s147, 0
      %s150 = sadd.s32 %s149, 1
      %s151 = scalar_select %p148, %s149, %s150
      %p154 = pneg %p148
      %p155 = scmp.eq.s32.totalorder %s19, 1
      %p156 = por %p154, %p155
      %p157 = scmp.ne.s32.totalorder %s149, %s152
      %p158 = scmp.eq.s32.totalorder %s19, 0
      %p159 = por %p157, %p158
      %p160 = scmp.ne.s32.totalorder %s149, %s152
      %p161 = scmp.eq.s32.totalorder %s24, 1
      %p162 = por %p160, %p161
      %p163 = scmp.ne.s32.totalorder %s152, %s153
      %p164 = scmp.eq.s32.totalorder %s24, 0
      %p165 = por %p163, %p164
      %p166 = scmp.ne.s32.totalorder %s152, %s153
      %p167 = scmp.eq.s32.totalorder %s25, 1
      %p168 = por %p166, %p167
      %p170 = scmp.ne.s32.totalorder %s153, %s169
      %p171 = scmp.eq.s32.totalorder %s25, 0
      %p172 = por %p170, %p171
      %s173 = ssub.s32 %s26, %s38
      %p174 = scmp.eq.s32.totalorder %s173, 0
      %s176 = sadd.s32 %s175, 1
      %s177 = scalar_select %p174, %s175, %s176
      %p180 = pneg %p174
      %p181 = scmp.eq.s32.totalorder %s19, 1
      %p182 = por %p180, %p181
      %p183 = scmp.ne.s32.totalorder %s175, %s178
      %p184 = scmp.eq.s32.totalorder %s19, 0
      %p185 = por %p183, %p184
      %p186 = scmp.ne.s32.totalorder %s175, %s178
      %p187 = scmp.eq.s32.totalorder %s24, 1
      %p188 = por %p186, %p187
      %p189 = scmp.ne.s32.totalorder %s178, %s179
      %p190 = scmp.eq.s32.totalorder %s24, 0
      %p191 = por %p189, %p190
      %p192 = scmp.ne.s32.totalorder %s178, %s179
      %p193 = scmp.eq.s32.totalorder %s25, 1
      %p194 = por %p192, %p193
      %p196 = scmp.ne.s32.totalorder %s179, %s195
      %p197 = scmp.eq.s32.totalorder %s25, 0
      %p198 = por %p196, %p197
      %s199 = ssub.s32 %s26, %s38
      %p200 = scmp.eq.s32.totalorder %s199, 0
      %s202 = sadd.s32 %s201, 1
      %s203 = scalar_select %p200, %s201, %s202
      %p206 = pneg %p200
      %p207 = scmp.eq.s32.totalorder %s19, 1
      %p208 = por %p206, %p207
      %p209 = scmp.ne.s32.totalorder %s201, %s204
      %p210 = scmp.eq.s32.totalorder %s19, 0
      %p211 = por %p209, %p210
      %p212 = scmp.ne.s32.totalorder %s201, %s204
      %p213 = scmp.eq.s32.totalorder %s24, 1
      %p214 = por %p212, %p213
      %p215 = scmp.ne.s32.totalorder %s204, %s205
      %p216 = scmp.eq.s32.totalorder %s24, 0
      %p217 = por %p215, %p216
      %p218 = scmp.ne.s32.totalorder %s204, %s205
      %p219 = scmp.eq.s32.totalorder %s25, 1
      %p220 = por %p218, %p219
      %p222 = scmp.ne.s32.totalorder %s205, %s221
      %p223 = scmp.eq.s32.totalorder %s25, 0
      %p224 = por %p222, %p223
      %p225 = scmp.le.s32.totalorder 1, %s19
      %p226 = scmp.lt.s32.totalorder %s19, 3
      %p227 = pnand %p225, %p226
      %p228 = pneg %p227
      // Predicated region
      $region9: #{tpu_custom_call.1} parent=5 // pred_check
        _
      $region10: #{tpu_custom_call.1} parent=5 // pred_check_branch
        %230 = sbr.rel (%p227) target = $region12
      $region11: #{tpu_custom_call.1} parent=5 // pred_region
        %s231 = ssub.s32 %s19, 1
        // Predicated region
        $region13: #{tpu_custom_call.1} parent=11 // pred_check
          %p232 = pneg %p57
        $region14: #{tpu_custom_call.1} parent=11 // pred_check_branch
          %234 = sbr.rel (%p232) target = $region16
        $region15: #{tpu_custom_call.1} parent=11 // pred_region
          %s236 = ssub.s32 128, 128
          %237 = vsyncadd [#allocation4], %s236
          %s238 = smul.addr %s29, 128
          %s239 = scalar_lea.hbm %s0, %s238
          %s241 = sshll.u32 [#allocation3], 4
          %s242 = int_to_ptr.vmem [resolvable:$true] %s241
          %244 = dma.hbm_to_vmem [thread:$0]  %s239, 128, %s242, [#allocation4]
        $region16: #{tpu_custom_call.1} parent=11 // pred_fallthru
          _
        // Predicated region
        $region17: #{tpu_custom_call.1} parent=11 // pred_check
          %p245 = pneg %p139
        $region18: #{tpu_custom_call.1} parent=11 // pred_check_branch
          %247 = sbr.rel (%p245) target = $region20
        $region19: #{tpu_custom_call.1} parent=11 // pred_region
          %p248 = scmp.lt.s32.totalorder %s29, 0
          %s249 = scalar_select %p248, %s29, 0
          %s250 = scalar_lea.vmem %s3, %s249
        $region20: #{tpu_custom_call.1} parent=11 // pred_fallthru
          _
      $region12: #{tpu_custom_call.1} parent=5 // pred_fallthru
        _
      %p251 = scmp.lt.s32.totalorder %s19, 2
      // Predicated region
      $region21: #{tpu_custom_call.1} parent=5 // pred_check
        %p252 = pneg %p251
      $region22: #{tpu_custom_call.1} parent=5 // pred_check_branch
        %254 = sbr.rel (%p252) target = $region24
      $region23: #{tpu_custom_call.1} parent=5 // pred_region
        // Predicated region
        $region25: #{tpu_custom_call.1} parent=23 // pred_check
          %p255 = pneg %p79
        $region26: #{tpu_custom_call.1} parent=23 // pred_check_branch
          %257 = sbr.rel (%p255) target = $region28
        $region27: #{tpu_custom_call.1} parent=23 // pred_region
          %s258 = sand.u32 %s19, 1
          %s259 = scalar_lea.sflag [#allocation7], %s258
          %s260 = sand.u32 %s69, 1
          %s261 = smul.addr %s260, 64
          %s262 = scalar_lea.vmem [#allocation6], %s261
          %s263 = smul.u32 16, %s27
          %s265 = ssub.s32 1024, 1024
          %266 = vsyncadd %s259, %s265
          %s267 = smul.addr %s263, 2
          %s268 = sadd.s32 %s26, %s267
          %s269 = smul.addr %s268, 64
          %s270 = scalar_lea.hbm %s1, %s269
          %s271 = sshll.u32 %s262, 4
          %s272 = int_to_ptr.vmem [resolvable:$true] %s271
          %277 = dma.hbm_to_vmem [thread:$0]  %s270, 1024, %s272, %s259, 128, 64, 4
        $region28: #{tpu_custom_call.1} parent=23 // pred_fallthru
          _
        // Predicated region
        $region29: #{tpu_custom_call.1} parent=23 // pred_check
          %p278 = pneg %p107
        $region30: #{tpu_custom_call.1} parent=23 // pred_check_branch
          %280 = sbr.rel (%p278) target = $region32
        $region31: #{tpu_custom_call.1} parent=23 // pred_region
          %s281 = sand.u32 %s19, 1
          %s282 = scalar_lea.sflag [#allocation7], %s281
          %s283 = sand.u32 %s97, 1
          %s284 = smul.addr %s283, 64
          %s285 = scalar_lea.vmem [#allocation8], %s284
          %s286 = smul.u32 16, %s27
          %s288 = ssub.s32 1024, 1024
          %289 = vsyncadd %s282, %s288
          %s290 = smul.addr %s286, 2
          %s291 = sadd.s32 %s26, %s290
          %s292 = smul.addr %s291, 64
          %s293 = scalar_lea.hbm %s2, %s292
          %s294 = sshll.u32 %s285, 4
          %s295 = int_to_ptr.vmem [resolvable:$true] %s294
          %300 = dma.hbm_to_vmem [thread:$0]  %s293, 1024, %s295, %s282, 128, 64, 4
        $region32: #{tpu_custom_call.1} parent=23 // pred_fallthru
          _
        // Predicated region
        $region33: #{tpu_custom_call.1} parent=23 // pred_check
          %p301 = pneg %p159
        $region34: #{tpu_custom_call.1} parent=23 // pred_check_branch
          %303 = sbr.rel (%p301) target = $region36
        $region35: #{tpu_custom_call.1} parent=23 // pred_region
          %p304 = scmp.lt.s32.totalorder %s26, 1
          %s305 = scalar_select %p304, %s26, 1
          %s306 = scalar_lea.vmem %s4, %s305
        $region36: #{tpu_custom_call.1} parent=23 // pred_fallthru
          _
        // Predicated region
        $region37: #{tpu_custom_call.1} parent=23 // pred_check
          %p307 = pneg %p185
        $region38: #{tpu_custom_call.1} parent=23 // pred_check_branch
          %309 = sbr.rel (%p307) target = $region40
        $region39: #{tpu_custom_call.1} parent=23 // pred_region
          %p310 = scmp.lt.s32.totalorder %s26, 1
          %s311 = scalar_select %p310, %s26, 1
          %s312 = scalar_lea.vmem %s5, %s311
        $region40: #{tpu_custom_call.1} parent=23 // pred_fallthru
          _
      $region24: #{tpu_custom_call.1} parent=5 // pred_fallthru
        _
      %p313 = scmp.le.s32.totalorder 1, %s19
      %p314 = scmp.lt.s32.totalorder %s19, 3
      %p315 = pnand %p313, %p314
      %p316 = pneg %p315
      // Predicated region
      $region41: #{tpu_custom_call.1} parent=5 // pred_check
        _
      $region42: #{tpu_custom_call.1} parent=5 // pred_check_branch
        %318 = sbr.rel (%p315) target = $region44
      $region43: #{tpu_custom_call.1} parent=5 // pred_region
        %s319 = ssub.s32 %s19, 1
        // Predicated region
        $region45: #{tpu_custom_call.1} parent=43 // pred_check
          %p320 = pneg %p57
        $region46: #{tpu_custom_call.1} parent=43 // pred_check_branch
          %322 = sbr.rel (%p320) target = $region48
        $region47: #{tpu_custom_call.1} parent=43 // pred_region
          %323 = dma.done [#allocation4], 128
        $region48: #{tpu_custom_call.1} parent=43 // pred_fallthru
          _
        %s324 = sand.u32 %s24, 1
        %s325 = scalar_lea.sflag [#allocation7], %s324
        %s326 = sand.u32 %s72, 1
        %s327 = smul.addr %s326, 64
        %s328 = scalar_lea.vmem [#allocation6], %s327
        // Predicated region
        $region49: #{tpu_custom_call.1} parent=43 // pred_check
          %p329 = pneg %p85
        $region50: #{tpu_custom_call.1} parent=43 // pred_check_branch
          %331 = sbr.rel (%p329) target = $region52
        $region51: #{tpu_custom_call.1} parent=43 // pred_region
          %332 = dma.done %s325, 1024
        $region52: #{tpu_custom_call.1} parent=43 // pred_fallthru
          _
        %s333 = sand.u32 %s24, 1
        %s334 = scalar_lea.sflag [#allocation7], %s333
        %s335 = sand.u32 %s100, 1
        %s336 = smul.addr %s335, 64
        %s337 = scalar_lea.vmem [#allocation8], %s336
        // Predicated region
        $region53: #{tpu_custom_call.1} parent=43 // pred_check
          %p338 = pneg %p113
        $region54: #{tpu_custom_call.1} parent=43 // pred_check_branch
          %340 = sbr.rel (%p338) target = $region56
        $region55: #{tpu_custom_call.1} parent=43 // pred_region
          %341 = dma.done %s334, 1024
        $region56: #{tpu_custom_call.1} parent=43 // pred_fallthru
          _
        %p342 = pneg %p57
        %p343 = pneg %p54
        %s344 = sand.u32 %s24, 1
        %s345 = scalar_lea.sflag [#allocation7], %s344
        %s346 = sand.u32 %s72, 1
        %s347 = smul.addr %s346, 64
        %s348 = scalar_lea.vmem [#allocation6], %s347
        %p349 = pneg %p85
        %p350 = pneg %p82
        %s351 = sand.u32 %s24, 1
        %s352 = scalar_lea.sflag [#allocation7], %s351
        %s353 = sand.u32 %s100, 1
        %s354 = smul.addr %s353, 64
        %s355 = scalar_lea.vmem [#allocation8], %s354
        %p356 = pneg %p113
        %p357 = pneg %p110
        %p358 = scmp.lt.s32.totalorder %s29, 0
        %s359 = scalar_select %p358, %s29, 0
        %s360 = scalar_lea.vmem %s3, %s359
        %p361 = pneg %p139
        %p362 = pneg %p136
        %p363 = scmp.lt.s32.totalorder %s28, 1
        %s364 = scalar_select %p363, %s28, 1
        %s365 = scalar_lea.vmem %s4, %s364
        %p366 = pneg %p165
        %p367 = pneg %p162
        %p368 = scmp.lt.s32.totalorder %s28, 1
        %s369 = scalar_select %p368, %s28, 1
        %s370 = scalar_lea.vmem %s5, %s369
        %p371 = pneg %p191
        %p372 = pneg %p188
        %p373 = pneg %p217
        %p374 = pneg %p214
        %s375 = sand.u32 %s204, 1
        %s376 = scalar_lea.sflag [#allocation5], %s375
        %s377 = sand.u32 %s204, 1
        %s378 = smul.addr %s377, 8
        %s379 = scalar_lea.vmem [#allocation9], %s378
        %s380 = smul.u32 16, %s29
        %s381 = smul.u32 16, %s29
        %p382 = scmp.lt.s32.totalorder %s29, 0
        %s383 = scalar_select %p382, %s29, 0
        %s384 = scalar_lea.vmem %s3, %s383
        %p385 = scmp.lt.s32.totalorder %s28, 1
        %s386 = scalar_select %p385, %s28, 1
        %s387 = scalar_lea.vmem %s4, %s386
        %p388 = scmp.lt.s32.totalorder %s28, 1
        %s389 = scalar_select %p388, %s28, 1
        %s390 = scalar_lea.vmem %s5, %s389
        %p392 = scmp.eq.s32.totalorder %s29, 0
        // Predicated region
        $region57: #{tpu_custom_call.1} parent=43 // pred_check
          %p393 = pneg %p392
        $region58: #{tpu_custom_call.1} parent=43 // pred_check_branch
          %395 = sbr.rel (%p393) target = $region60
        $region59: #{tpu_custom_call.1} parent=43 // pred_region
          %v396 = vld [vmem:[%s390] sm:$0x1]
          %v398 = vlaneseq
          %v399 = vshrl.u32 %v398, 7
          %v400 = vsub.s32 0, %v399
          %v401 = vrot.slane %v396, %v400
          %v403 = vadd.f32 %v401, 0.0
          %404 = vst [vmem:[%s379] sm:$0xff] %v403
          %405 = vst [vmem:[#allocation2] sm:$0xff] 0.0
        $region60: #{tpu_custom_call.1} parent=43 // pred_fallthru
          _
        %v406 = vld [vmem:[#allocation3] sm:$0xff]
        %v407 = vld [vmem:[%s379] sm:$0xff]
        %v408 = vpack.c.bf16 %v406, %v406
        %v409 = vld [vmem:[%s328] sm:$0xf]
        %v410 = vld [vmem:[%s328 + $0x4] sm:$0xf]
        %v411 = vld [vmem:[%s328 + $0x8] sm:$0xf]
        %v412 = vld [vmem:[%s328 + $0xc] sm:$0xf]
        %v413 = vld [vmem:[%s328 + $0x10] sm:$0xf]
        %v414 = vld [vmem:[%s328 + $0x14] sm:$0xf]
        %v415 = vld [vmem:[%s328 + $0x18] sm:$0xf]
        %v416 = vld [vmem:[%s328 + $0x1c] sm:$0xf]
        %v417 = vld [vmem:[%s328 + $0x20] sm:$0xf]
        %v418 = vld [vmem:[%s328 + $0x24] sm:$0xf]
        %v419 = vld [vmem:[%s328 + $0x28] sm:$0xf]
        %v420 = vld [vmem:[%s328 + $0x2c] sm:$0xf]
        %v421 = vld [vmem:[%s328 + $0x30] sm:$0xf]
        %v422 = vld [vmem:[%s328 + $0x34] sm:$0xf]
        %v423 = vld [vmem:[%s328 + $0x38] sm:$0xf]
        %v424 = vld [vmem:[%s328 + $0x3c] sm:$0xf]
        %v441 = vunpack.c.l.b16 %v409
        %v442 = vunpack.c.l.b16 %v410
        %v443 = vunpack.c.l.b16 %v411
        %v444 = vunpack.c.l.b16 %v412
        %v445 = vunpack.c.l.b16 %v413
        %v446 = vunpack.c.l.b16 %v414
        %v447 = vunpack.c.l.b16 %v415
        %v448 = vunpack.c.l.b16 %v416
        %v449 = vunpack.c.l.b16 %v417
        %v450 = vunpack.c.l.b16 %v418
        %v451 = vunpack.c.l.b16 %v419
        %v452 = vunpack.c.l.b16 %v420
        %v453 = vunpack.c.l.b16 %v421
        %v454 = vunpack.c.l.b16 %v422
        %v455 = vunpack.c.l.b16 %v423
        %v456 = vunpack.c.l.b16 %v424
        %v457 = vpack.c.b16 %v442, %v441
        %v458 = vpack.c.b16 %v444, %v443
        %v459 = vpack.c.b16 %v446, %v445
        %v460 = vpack.c.b16 %v448, %v447
        %v461 = vpack.c.b16 %v450, %v449
        %v462 = vpack.c.b16 %v452, %v451
        %v463 = vpack.c.b16 %v454, %v453
        %v464 = vpack.c.b16 %v456, %v455
        %473 = vmatprep.subr.bf16.mxu0 0
        %474 = vmatpush1.bf16.msra.mxu0 %v457
        %475 = vmatprep.subr.bf16.mxu0 0
        %476 = vmatpush1.bf16.msra.mxu0 %v458
        %477 = vmatprep.subr.bf16.mxu0 0
        %478 = vmatpush1.bf16.msra.mxu0 %v459
        %479 = vmatprep.subr.bf16.mxu0 0
        %480 = vmatpush1.bf16.msra.mxu0 %v460
        %481 = vmatprep.subr.bf16.mxu0 0
        %482 = vmatpush1.bf16.msra.mxu0 %v461
        %483 = vmatprep.subr.bf16.mxu0 0
        %484 = vmatpush1.bf16.msra.mxu0 %v462
        %485 = vmatprep.subr.bf16.mxu0 0
        %486 = vmatpush1.bf16.msra.mxu0 %v463
        %487 = vmatprep.subr.bf16.mxu0 0
        %488 = vmatpush1.bf16.msra.mxu0 %v464
        %489 = vmatprep.subr.bf16.mxu0 0
        %490 = vmatpush1.bf16.msra.mxu0 0
        %491 = vmatprep.subr.bf16.mxu0 0
        %492 = vmatpush1.bf16.msra.mxu0 0
        %493 = vmatprep.subr.bf16.mxu0 0
        %494 = vmatpush1.bf16.msra.mxu0 0
        %495 = vmatprep.subr.bf16.mxu0 0
        %496 = vmatpush1.bf16.msra.mxu0 0
        %497 = vmatprep.subr.bf16.mxu0 0
        %498 = vmatpush1.bf16.msra.mxu0 0
        %499 = vmatprep.subr.bf16.mxu0 0
        %500 = vmatpush1.bf16.msra.mxu0 0
        %501 = vmatprep.subr.bf16.mxu0 0
        %502 = vmatpush1.bf16.msra.mxu0 0
        %503 = vmatprep.subr.bf16.mxu0 0
        %504 = vmatpush1.bf16.msra.mxu0 0
        %505 = vmatprep.mubr.bf16.mxu0 0
        %506 = vmatmul.mubr.bf16.gmra.mrb[0].mxu0 %v408
        %v507 = vpop.f32.mrb[0].mxu0
        %v508 = vadd.f32 0.0, %v507
        %v509 = vpop.f32.mrb[0].mxu0
        %v510 = vpop.f32.mrb[0].mxu0
        %v511 = vpop.f32.mrb[0].mxu0
        %512 = vdwg.mxu0
        %v513 = vadd.f32 %v407, %v508
        %514 = vst [vmem:[%s379] sm:$0xff] %v513
        %v515 = vld [vmem:[%s384] sm:$0x1]
        %v517 = vlaneseq
        %v518 = vshrl.u32 %v517, 7
        %v519 = vsub.s32 0, %v518
        %v520 = vrot.slane %v515, %v519
        %v522 = vmul.f32 %v406, %v520
        %v523 = vpack.c.bf16 %v522, %v522
        %v524 = vld [vmem:[#allocation2] sm:$0xff]
        %v525 = vld [vmem:[%s337] sm:$0xf]
        %v526 = vld [vmem:[%s337 + $0x4] sm:$0xf]
        %v527 = vld [vmem:[%s337 + $0x8] sm:$0xf]
        %v528 = vld [vmem:[%s337 + $0xc] sm:$0xf]
        %v529 = vld [vmem:[%s337 + $0x10] sm:$0xf]
        %v530 = vld [vmem:[%s337 + $0x14] sm:$0xf]
        %v531 = vld [vmem:[%s337 + $0x18] sm:$0xf]
        %v532 = vld [vmem:[%s337 + $0x1c] sm:$0xf]
        %v533 = vld [vmem:[%s337 + $0x20] sm:$0xf]
        %v534 = vld [vmem:[%s337 + $0x24] sm:$0xf]
        %v535 = vld [vmem:[%s337 + $0x28] sm:$0xf]
        %v536 = vld [vmem:[%s337 + $0x2c] sm:$0xf]
        %v537 = vld [vmem:[%s337 + $0x30] sm:$0xf]
        %v538 = vld [vmem:[%s337 + $0x34] sm:$0xf]
        %v539 = vld [vmem:[%s337 + $0x38] sm:$0xf]
        %v540 = vld [vmem:[%s337 + $0x3c] sm:$0xf]
        %v557 = vunpack.c.l.b16 %v525
        %v558 = vunpack.c.l.b16 %v526
        %v559 = vunpack.c.l.b16 %v527
        %v560 = vunpack.c.l.b16 %v528
        %v561 = vunpack.c.l.b16 %v529
        %v562 = vunpack.c.l.b16 %v530
        %v563 = vunpack.c.l.b16 %v531
        %v564 = vunpack.c.l.b16 %v532
        %v565 = vunpack.c.l.b16 %v533
        %v566 = vunpack.c.l.b16 %v534
        %v567 = vunpack.c.l.b16 %v535
        %v568 = vunpack.c.l.b16 %v536
        %v569 = vunpack.c.l.b16 %v537
        %v570 = vunpack.c.l.b16 %v538
        %v571 = vunpack.c.l.b16 %v539
        %v572 = vunpack.c.l.b16 %v540
        %v573 = vpack.c.b16 %v558, %v557
        %v574 = vpack.c.b16 %v560, %v559
        %v575 = vpack.c.b16 %v562, %v561
        %v576 = vpack.c.b16 %v564, %v563
        %v577 = vpack.c.b16 %v566, %v565
        %v578 = vpack.c.b16 %v568, %v567
        %v579 = vpack.c.b16 %v570, %v569
        %v580 = vpack.c.b16 %v572, %v571
        %589 = vmatprep.subr.bf16.mxu0 0
        %590 = vmatpush1.bf16.msra.mxu0 %v573
        %591 = vmatprep.subr.bf16.mxu0 0
        %592 = vmatpush1.bf16.msra.mxu0 %v574
        %593 = vmatprep.subr.bf16.mxu0 0
        %594 = vmatpush1.bf16.msra.mxu0 %v575
        %595 = vmatprep.subr.bf16.mxu0 0
        %596 = vmatpush1.bf16.msra.mxu0 %v576
        %597 = vmatprep.subr.bf16.mxu0 0
        %598 = vmatpush1.bf16.msra.mxu0 %v577
        %599 = vmatprep.subr.bf16.mxu0 0
        %600 = vmatpush1.bf16.msra.mxu0 %v578
        %601 = vmatprep.subr.bf16.mxu0 0
        %602 = vmatpush1.bf16.msra.mxu0 %v579
        %603 = vmatprep.subr.bf16.mxu0 0
        %604 = vmatpush1.bf16.msra.mxu0 %v580
        %605 = vmatprep.subr.bf16.mxu0 0
        %606 = vmatpush1.bf16.msra.mxu0 0
        %607 = vmatprep.subr.bf16.mxu0 0
        %608 = vmatpush1.bf16.msra.mxu0 0
        %609 = vmatprep.subr.bf16.mxu0 0
        %610 = vmatpush1.bf16.msra.mxu0 0
        %611 = vmatprep.subr.bf16.mxu0 0
        %612 = vmatpush1.bf16.msra.mxu0 0
        %613 = vmatprep.subr.bf16.mxu0 0
        %614 = vmatpush1.bf16.msra.mxu0 0
        %615 = vmatprep.subr.bf16.mxu0 0
        %616 = vmatpush1.bf16.msra.mxu0 0
        %617 = vmatprep.subr.bf16.mxu0 0
        %618 = vmatpush1.bf16.msra.mxu0 0
        %619 = vmatprep.subr.bf16.mxu0 0
        %620 = vmatpush1.bf16.msra.mxu0 0
        %621 = vmatprep.mubr.bf16.mxu0 0
        %622 = vmatmul.mubr.bf16.gmra.mrb[0].mxu0 %v523
        %v623 = vpop.f32.mrb[0].mxu0
        %v624 = vadd.f32 0.0, %v623
        %v625 = vpop.f32.mrb[0].mxu0
        %v626 = vpop.f32.mrb[0].mxu0
        %v627 = vpop.f32.mrb[0].mxu0
        %628 = vdwg.mxu0
        %v629 = vadd.f32 %v524, %v624
        %630 = vst [vmem:[#allocation2] sm:$0xff] %v629
        // Predicated region
        $region61: #{tpu_custom_call.1} parent=43 // pred_check
          %p631 = pneg %p392
        $region62: #{tpu_custom_call.1} parent=43 // pred_check_branch
          %633 = sbr.rel (%p631) target = $region64
        $region63: #{tpu_custom_call.1} parent=43 // pred_region
          %v634 = vld [vmem:[%s379] sm:$0xff]
          %v635 = vld [vmem:[%s387] sm:$0x1]
          %v636 = vld [vmem:[#allocation2] sm:$0xff]
          %v638 = vlaneseq
          %v639 = vshrl.u32 %v638, 7
          %v640 = vsub.s32 0, %v639
          %v641 = vrot.slane %v635, %v640
          %v643 = vmul.f32 %v641, %v636
          %v644 = vadd.f32 %v634, %v643
          %645 = vst [vmem:[%s379] sm:$0xff] %v644
        $region64: #{tpu_custom_call.1} parent=43 // pred_fallthru
          _
        %s646 = sand.u32 %s204, 1
        %s647 = scalar_lea.sflag [#allocation5], %s646
        %s648 = sand.u32 %s204, 1
        %s649 = smul.addr %s648, 8
        %s650 = scalar_lea.vmem [#allocation9], %s649
        // Predicated region
        $region65: #{tpu_custom_call.1} parent=43 // pred_check
          %p651 = pneg %p214
        $region66: #{tpu_custom_call.1} parent=43 // pred_check_branch
          %653 = sbr.rel (%p651) target = $region68
        $region67: #{tpu_custom_call.1} parent=43 // pred_region
          %s655 = ssub.s32 128, 128
          %656 = vsyncadd %s647, %s655
          %s657 = smul.addr %s28, 128
          %s658 = scalar_lea.hbm %s6, %s657
          %s660 = sshll.u32 %s650, 4
          %s661 = int_to_ptr.vmem [resolvable:$true] %s660
          %663 = dma.vmem_to_hbm [thread:$0]  %s661, 128, %s658, %s647
        $region68: #{tpu_custom_call.1} parent=43 // pred_fallthru
          _
      $region44: #{tpu_custom_call.1} parent=5 // pred_fallthru
        _
      %p664 = scmp.le.s32.totalorder 2, %s19
      // Predicated region
      $region69: #{tpu_custom_call.1} parent=5 // pred_check
        %p665 = pneg %p664
      $region70: #{tpu_custom_call.1} parent=5 // pred_check_branch
        %667 = sbr.rel (%p665) target = $region72
      $region71: #{tpu_custom_call.1} parent=5 // pred_region
        %s668 = ssub.s32 %s19, 2
        // Predicated region
        $region73: #{tpu_custom_call.1} parent=71 // pred_check
          %p669 = pneg %p220
        $region74: #{tpu_custom_call.1} parent=71 // pred_check_branch
          %671 = sbr.rel (%p669) target = $region76
        $region75: #{tpu_custom_call.1} parent=71 // pred_region
          %s672 = sand.u32 %s205, 1
          %s673 = scalar_lea.sflag [#allocation5], %s672
          %s674 = sand.u32 %s205, 1
          %s675 = smul.addr %s674, 8
          %s676 = scalar_lea.vmem [#allocation9], %s675
          %677 = dma.done %s673, 128
        $region76: #{tpu_custom_call.1} parent=71 // pred_fallthru
          _
      $region72: #{tpu_custom_call.1} parent=5 // pred_fallthru
        _
    $region6: #{tpu_custom_call.1} parent=1 // loop_footer
      %s23 = sadd.s32 1, %s19
    $region7: #{tpu_custom_call.1} parent=1 // loop_footer_branch
      %18 = sbr.rel target = $region3
    $region8: #{tpu_custom_call.1} parent=1 // loop_exit
      _
    %678 = vsyncpa [#allocation4], 1
    %s679 = scalar_lea.sflag [#allocation4], 1
    %680 = vsyncpa %s679, 1
    %681 = vsyncpa [#allocation7], 1
    %s682 = scalar_lea.sflag [#allocation7], 1
    %683 = vsyncpa %s682, 1
    %684 = vsyncpa [#allocation5], 1
    %s685 = scalar_lea.sflag [#allocation5], 1
    %686 = vsyncpa %s685, 1

</llo_original>
